<compile_context>
chip_gen: v7x
topology: tpu7x:2x2x1
jax: 0.10.0
libtpu: 0.0.40
codegen_flags: <defaults>
</compile_context>

<pallas_src>
import jax
import jax.numpy as jnp
from jax.experimental import pallas as pl
from jax.experimental.pallas import tpu as pltpu

GAMMA_MIN = -13.3
GAMMA_MAX = 5.0

SUBLANES = 8
TARGET_BLOCK_BYTES = 2 * 1024 * 1024   # ~2 MiB per block (85%+ of HBM roofline)
SMALL_N = 4096                          # below one slab, skip the kernel launch


def _round_up(x, m):
    return ((x + m - 1) // m) * m


def _schedule_kernel(params_ref, t_ref, o_ref):
    # params_ref lives in SMEM: params_ref[0] = b, params_ref[1] = w
    b = params_ref[0]
    w_abs = jnp.abs(params_ref[1])          # keep abs in-kernel (no wrapper prescale)
    x = t_ref[...].astype(jnp.float32)
    o_ref[...] = (b + w_abs * x).astype(o_ref.dtype)


def learned_linear_schedule(t, b, w):
    """Pallas implementation of gamma(t) = b + |w| * t (any shape, any float dtype)."""
    orig_shape = t.shape
    # Match PyTorch promotion: float32 params * half-precision t -> float32 output.
    out_dtype = jnp.promote_types(t.dtype, jnp.float32)
    b32 = jnp.asarray(b, jnp.float32)
    w32 = jnp.asarray(w, jnp.float32)

    flat = t.reshape(-1)
    n = flat.shape[0]

    # --- tiny-input fallback: dispatch + DMA setup dwarfs the FLOPs below ~1 slab ---
    if n < SMALL_N:
        out = (b32 + jnp.abs(w32) * flat.astype(jnp.float32)).astype(out_dtype)
        return out.reshape(orig_shape)

    # --- pick a lane-dense width that divides n when possible (zero-copy reshape) ---
    if n % 512 == 0:
        cols = 512
    elif n % 256 == 0:
        cols = 256
    elif n % 128 == 0:
        cols = 128
    else:
        cols = 512                          # unaligned: kernel handles the prefix only

    n_main = (n // cols) * cols             # lane-aligned prefix processed by the kernel
    rows = n_main // cols

    in_item = jnp.dtype(t.dtype).itemsize
    out_item = jnp.dtype(out_dtype).itemsize
    itemsize = max(in_item, out_item)

    # ~2 MiB blocks (dtype-aware), tile rows a multiple of 8 for the (8,128) rule.
    tile_r = max(SUBLANES,
                 (TARGET_BLOCK_BYTES // (cols * itemsize)) // SUBLANES * SUBLANES)
    if rows <= tile_r:
        # Medium input fits one block: split in two (still a multiple of 8) so both
        # v7x TensorCores get work; harmless on single-TC v5e/v6e.
        tile_r = max(SUBLANES, _round_up(pl.cdiv(rows, 2), SUBLANES))
    num_blocks = pl.cdiv(rows, tile_r)      # ragged last block handled by Pallas

    main = flat if n_main == n else flat[:n_main]
    slab = main.reshape(rows, cols)         # zero-copy when n is a multiple of cols

    params = jnp.stack([b32, w32])

    out_main = pl.pallas_call(
        _schedule_kernel,
        out_shape=jax.ShapeDtypeStruct((rows, cols), out_dtype),
        grid=(num_blocks,),
        in_specs=[
            pl.BlockSpec(memory_space=pltpu.MemorySpace.SMEM),   # scalar params
            pl.BlockSpec((tile_r, cols), lambda i: (i, 0)),      # t tile in VMEM
        ],
        out_specs=pl.BlockSpec((tile_r, cols), lambda i: (i, 0)),
        compiler_params=pltpu.CompilerParams(
            dimension_semantics=("parallel",),   # shard blocks across v7x's 2 TCs
        ),
        cost_estimate=pl.CostEstimate(
            flops=2 * n_main, transcendentals=0,
            bytes_accessed=n_main * (in_item + out_item) + 8),
    )(params, slab)

    if n_main == n:
        return out_main.reshape(orig_shape)

    # <cols-element tail computed in plain jnp (no full-tensor pad/slice passes).
    tail = flat[n_main:]
    tail_out = (b32 + jnp.abs(w32) * tail.astype(jnp.float32)).astype(out_dtype)
    return jnp.concatenate([out_main.reshape(-1), tail_out]).reshape(orig_shape)


if __name__ == "__main__":
    key = jax.random.PRNGKey(0)
    # Deterministic parameter init mirroring the PyTorch __init__:
    #   b = gamma_min, w = gamma_max - gamma_min
    b = GAMMA_MIN
    w = GAMMA_MAX - GAMMA_MIN

    # Case 1: typical tiny timestep vector (batch of 8) -> plain-jnp fast path.
    t1 = jax.random.uniform(key, (8,), dtype=jnp.float32)
    out1 = learned_linear_schedule(t1, b, w)
    jax.block_until_ready(out1)
    ref1 = b + abs(w) * t1
    assert out1.shape == t1.shape and out1.dtype == jnp.float32
    assert jnp.allclose(out1, ref1, atol=1e-5), (out1, ref1)

    # Case 2: lane-aligned input (one 4096-element slab) -> Pallas kernel, zero-copy path.
    t2 = jax.random.uniform(jax.random.PRNGKey(1), (8, 512), dtype=jnp.float32)
    out2 = learned_linear_schedule(t2, b, w)
    jax.block_until_ready(out2)
    ref2 = b + abs(w) * t2
    assert out2.shape == t2.shape and out2.dtype == jnp.float32
    assert jnp.allclose(out2, ref2, atol=1e-5), (out2, ref2)

    # Case 3: unaligned bf16 input -> kernel prefix (ragged last block) + jnp tail,
    #         f32 output per PyTorch type promotion.
    t3 = jax.random.uniform(jax.random.PRNGKey(2), (9, 600), dtype=jnp.bfloat16)
    out3 = learned_linear_schedule(t3, b, w)
    jax.block_until_ready(out3)
    ref3 = b + abs(w) * t3.astype(jnp.float32)
    assert out3.shape == t3.shape and out3.dtype == jnp.float32
    assert jnp.allclose(out3, ref3, atol=1e-4), (out3, ref3)

    print("KERNEL_OK")
</pallas_src>

<mosaic_0001>
module attributes {stable_mosaic.version = 11 : i64} {
  func.func @_schedule_kernel(%arg0: i32, %arg1: memref<2xf32, #tpu.memory_space<smem>>, %arg2: memref<8x512xf32, #tpu.memory_space<vmem>>, %arg3: memref<8x512xf32, #tpu.memory_space<vmem>>) attributes {dimension_semantics = [#tpu.dimension_semantics<parallel>], iteration_bounds = array<i64: 1>, scalar_prefetch = 0 : i64, scratch_operands = 0 : i64, tpu.core_type = #tpu.core_type<tc>, window_params = [{transform_indices = @transform_0, window_bounds = array<i64: 2>}, {transform_indices = @transform_1, window_bounds = array<i64: 8, 512>}, {transform_indices = @transform_2, window_bounds = array<i64: 8, 512>}]} {
    %c0 = arith.constant 0 : index
    %0 = memref.load %arg1[%c0] : memref<2xf32, #tpu.memory_space<smem>>
    %c1 = arith.constant 1 : index
    %1 = memref.load %arg1[%c1] : memref<2xf32, #tpu.memory_space<smem>>
    %2 = math.absf %1 : f32
    %c0_0 = arith.constant 0 : index
    %c0_1 = arith.constant 0 : index
    %3 = vector.load %arg2[%c0_0, %c0_1] : memref<8x512xf32, #tpu.memory_space<vmem>>, vector<8x512xf32>
    %4 = vector.broadcast %2 : f32 to vector<8x512xf32>
    %5 = arith.mulf %4, %3 : vector<8x512xf32>
    %6 = vector.broadcast %0 : f32 to vector<8x512xf32>
    %7 = arith.addf %6, %5 : vector<8x512xf32>
    %c0_2 = arith.constant 0 : index
    %c0_3 = arith.constant 0 : index
    %8 = vector.load %arg3[%c0_2, %c0_3] : memref<8x512xf32, #tpu.memory_space<vmem>>, vector<8x512xf32>
    tpu.vector_store %arg3[%c0_2, %c0_3], %7 {strides = array<i32>} : memref<8x512xf32, #tpu.memory_space<vmem>>, vector<8x512xf32>,
    return
  }
  func.func @transform_0(%arg0: i32) -> i32 {
    %c0_i32 = arith.constant 0 : i32
    %c0_i32_0 = arith.constant 0 : i32
    return %c0_i32 : i32
  }
  func.func @transform_1(%arg0: i32) -> (i32, i32) {
    %c0_i32 = arith.constant 0 : i32
    %c0_i32_0 = arith.constant 0 : i32
    return %arg0, %c0_i32 : i32, i32
  }
  func.func @transform_2(%arg0: i32) -> (i32, i32) {
    %c0_i32 = arith.constant 0 : i32
    %c0_i32_0 = arith.constant 0 : i32
    return %arg0, %c0_i32 : i32, i32
  }
}

</mosaic_0001>

<llo_original>
// kernel: tpu_custom_call.1
$region0: #{tpu_custom_call.1}
  #allocation0 [shape = 'u32[]', space=smem, size = 0x4, offset = 0x4, fixed_abs, tag = 'smem constant byte address 0x4 - core index']
  #allocation1 [shape = 'u32[144,128]{1,0:T(1,128)}', space=vmem, size = 0x12000, scoped, tag = 'internal scratch']
  %s0 = inlined_call_operand.hbm [shape: f32[2], index: 0, kind: input, shape index: {}]
  %s1 = inlined_call_operand.hbm [shape: f32[8,512], index: 1, kind: input, shape index: {}]
  %s2 = inlined_call_operand.hbm [shape: f32[8,512], index: 2, kind: output, shape index: {}]
  %s3 = sld [smem:[#allocation0]]
  $region26: #{tpu_custom_call.1} parent=0
    _
  %s5 = ssub.s32 1, %s3
  %s6 = scalar_select 0, %s5, %s3
  $region1: #{tpu_custom_call.1} parent=0
    #allocation2 [shape = 'u8[512]{0}', space=smem, size = 0x200, scoped, tag = 'input window, operand 0, single buffered']
    #allocation3 [shape = 's32[1]{0}', space=sflag, size = 0x4, scoped, tag = 'scoped memory for tpu_custom_call.1']
    #allocation4 [shape = 's32[1]{0}', space=sflag, size = 0x4, scoped, tag = 'scoped memory for tpu_custom_call.1']
    #allocation5 [shape = 's32[1]{0}', space=sflag, size = 0x4, scoped, tag = 'scoped memory for tpu_custom_call.1']
    #allocation6 [shape = 'u8[16384]{0}', space=vmem, size = 0x4000, scoped, tag = 'input window, operand 1, single buffered']
    #allocation7 [shape = 'u8[16384]{0}', space=vmem, size = 0x4000, scoped, tag = 'output window, operand 0, single buffered']
    %7 = vsyncpa [#allocation5], 0
    %8 = vsyncpa [#allocation3], 0
    %9 = vsyncpa [#allocation4], 0
    // Predicated region
    $region2: #{tpu_custom_call.1} parent=1 // pred_check
      _
    $region3: #{tpu_custom_call.1} parent=1 // pred_check_branch
      %11 = sbr.rel (0) target = $region5
    $region4: #{tpu_custom_call.1} parent=1 // pred_region
      %s13 = ssub.s32 16, 16
      %14 = vsyncadd [#allocation5], %s13
      %17 = dma.hbm_to_smem %s0, 16, [#allocation2], [#allocation5]
    $region5: #{tpu_custom_call.1} parent=1 // pred_fallthru
      _
    // Predicated region
    $region6: #{tpu_custom_call.1} parent=1 // pred_check
      _
    $region7: #{tpu_custom_call.1} parent=1 // pred_check_branch
      %19 = sbr.rel (0) target = $region9
    $region8: #{tpu_custom_call.1} parent=1 // pred_region
      %s21 = ssub.s32 512, 512
      %22 = vsyncadd [#allocation3], %s21
      %s24 = sshll.u32 [#allocation6], 4
      %s25 = int_to_ptr.vmem [resolvable:$true] %s24
      %27 = dma.hbm_to_vmem [thread:$0]  %s1, 512, %s25, [#allocation3]
    $region9: #{tpu_custom_call.1} parent=1 // pred_fallthru
      _
    // Predicated region
    $region10: #{tpu_custom_call.1} parent=1 // pred_check
      _
    $region11: #{tpu_custom_call.1} parent=1 // pred_check_branch
      %29 = sbr.rel (0) target = $region13
    $region12: #{tpu_custom_call.1} parent=1 // pred_region
      %30 = dma.done [#allocation5], 16
    $region13: #{tpu_custom_call.1} parent=1 // pred_fallthru
      _
    // Predicated region
    $region14: #{tpu_custom_call.1} parent=1 // pred_check
      _
    $region15: #{tpu_custom_call.1} parent=1 // pred_check_branch
      %32 = sbr.rel (0) target = $region17
    $region16: #{tpu_custom_call.1} parent=1 // pred_region
      %33 = dma.done [#allocation3], 512
    $region17: #{tpu_custom_call.1} parent=1 // pred_fallthru
      _
    %34 = sfence
    %s35 = sld [smem:[#allocation2]]
    %s36 = sld [smem:[#allocation2 + $0x1]]
    %s37 = sand.u32 2147483647, %s36
    %v38 = vld [vmem:[#allocation6] sm:$0xff]
    %v39 = vld [vmem:[#allocation6 + $0x8] sm:$0xff]
    %v40 = vld [vmem:[#allocation6 + $0x10] sm:$0xff]
    %v41 = vld [vmem:[#allocation6 + $0x18] sm:$0xff]
    %v42 = vstv %s37
    %v43 = vmul.f32 %v42, %v38
    %v44 = vmul.f32 %v42, %v39
    %v45 = vmul.f32 %v42, %v40
    %v46 = vmul.f32 %v42, %v41
    %v47 = vstv %s35
    %v48 = vadd.f32 %v47, %v43
    %v49 = vadd.f32 %v47, %v44
    %v50 = vadd.f32 %v47, %v45
    %v51 = vadd.f32 %v47, %v46
    %52 = vst [vmem:[#allocation7] sm:$0xff] %v48
    %53 = vst [vmem:[#allocation7 + $0x8] sm:$0xff] %v49
    %54 = vst [vmem:[#allocation7 + $0x10] sm:$0xff] %v50
    %55 = vst [vmem:[#allocation7 + $0x18] sm:$0xff] %v51
    // Predicated region
    $region18: #{tpu_custom_call.1} parent=1 // pred_check
      _
    $region19: #{tpu_custom_call.1} parent=1 // pred_check_branch
      %57 = sbr.rel (0) target = $region21
    $region20: #{tpu_custom_call.1} parent=1 // pred_region
      %s59 = ssub.s32 512, 512
      %60 = vsyncadd [#allocation4], %s59
      %s62 = sshll.u32 [#allocation7], 4
      %s63 = int_to_ptr.vmem [resolvable:$true] %s62
      %65 = dma.vmem_to_hbm [thread:$0]  %s63, 512, %s2, [#allocation4]
    $region21: #{tpu_custom_call.1} parent=1 // pred_fallthru
      _
    // Predicated region
    $region22: #{tpu_custom_call.1} parent=1 // pred_check
      _
    $region23: #{tpu_custom_call.1} parent=1 // pred_check_branch
      %67 = sbr.rel (0) target = $region25
    $region24: #{tpu_custom_call.1} parent=1 // pred_region
      %68 = dma.done [#allocation4], 512
    $region25: #{tpu_custom_call.1} parent=1 // pred_fallthru
      _
    %69 = vsyncpa [#allocation3], 1
    %70 = vsyncpa [#allocation4], 1
    %71 = vsyncpa [#allocation5], 1

</llo_original>
